<compile_context>
chip_gen: v6e
topology: v6e:2x2x1
jax: 0.10.0
libtpu: 0.0.40
codegen_flags: <defaults>
</compile_context>

<pallas_src>
import functools

import jax
import jax.numpy as jnp
from jax import lax
from jax.experimental import pallas as pl
from jax.experimental.pallas import tpu as pltpu

_MIB = 1024 * 1024


def _tpu_vmem_capacity_bytes():
    """Physical VMEM per TensorCore; conservative default if the query is unavailable."""
    default = 64 * _MIB
    try:
        info = pltpu.get_tpu_info()
        return int(getattr(info, "vmem_capacity_bytes", default))
    except Exception:
        return default


def _choose_spatial_tile(p, c, itemsize, budget_bytes):
    """Largest 128-aligned spatial tile whose (C, tile) x-block fits the budget, or full P.

    Pairs with a pl.cdiv grid + in-kernel tail masking, so the tile never needs to
    divide P and there is no full-(C, P) fallback that could exceed VMEM.
    """
    max_tp = (budget_bytes // max(1, c * itemsize)) // 128 * 128
    if max_tp < 128:
        # C so large that even one 128-lane tile exceeds the budget; a single aligned
        # tile is the smallest legal block without also tiling the channel axis.
        max_tp = 128
    if p <= max_tp:
        return p          # full spatial extent is always a legal block shape
    return max_tp         # multiple of 128 -> legal last-dim block size


def attend_kernel(w_ref, expt_ref, x_ref, o_ref, m_sc, d_sc, acc_sc,
                  *, spatial_size, tile_p):
    # w_ref:    (H, C)   block-diagonal grouped 1x1-conv weight, in x's dtype
    # expt_ref: (H, C)   one-hot head->channel selector (f32), used only in finalize
    # x_ref:    (C, TP)  one batch's channel slab for the current spatial tile (storage dtype)
    # o_ref:    (1, C)   lane-dense per-batch output row
    # m_sc/d_sc:(H, 1)   running softmax max / denominator (f32 scratch)
    # acc_sc:   (H, C)   running un-normalized per-head weighted sums (f32 scratch)
    pt = pl.program_id(1)

    @pl.when(pt == 0)
    def _init():
        m_sc[...] = jnp.full(m_sc.shape, -jnp.inf, dtype=jnp.float32)
        d_sc[...] = jnp.zeros(d_sc.shape, dtype=jnp.float32)
        acc_sc[...] = jnp.zeros(acc_sc.shape, dtype=jnp.float32)

    x = x_ref[...]                  # (C, TP), storage dtype (no full-tile f32 cast)
    w = w_ref[...]                  # (H, C), same dtype as x

    # Grouped 1x1-conv logits for this tile (MXU, f32 accumulate, default precision).
    # The per-head conv bias is omitted: it is constant over the softmax axis and
    # cancels exactly.
    logits = jnp.dot(w, x, preferred_element_type=jnp.float32)        # (H, TP)

    if spatial_size % tile_p != 0:
        # Ragged tail tile: mask out-of-range lanes so padded/garbage columns
        # contribute exactly nothing (e -> 0, x -> 0).
        col = lax.broadcasted_iota(jnp.int32, (1, tile_p), 1) + pt * tile_p
        valid = col < spatial_size                                    # (1, TP)
        logits = jnp.where(valid, logits, -jnp.inf)
        x = jnp.where(valid, x, jnp.zeros((), x.dtype))

    # Online softmax statistics per head.
    m_prev = m_sc[...]
    m_new = jnp.maximum(m_prev, jnp.max(logits, axis=-1, keepdims=True))   # (H, 1)
    alpha = jnp.exp(m_prev - m_new)                                        # (H, 1)
    e = jnp.exp(logits - m_new)                                            # (H, TP) f32
    d_sc[...] = alpha * d_sc[...] + jnp.sum(e, axis=-1, keepdims=True)
    m_sc[...] = m_new

    # part[h, c] = sum_p e[h, p] * x[c, p]  (MXU, contract the spatial axis; e cast
    # down to x's dtype so the MXU runs native single-pass with f32 accumulation).
    part = lax.dot_general(e.astype(x.dtype), x, (((1,), (1,)), ((), ())),
                           preferred_element_type=jnp.float32)             # (H, C)
    acc_sc[...] = alpha * acc_sc[...] + part

    @pl.when(pt == pl.num_programs(1) - 1)
    def _finalize():
        expt = expt_ref[...]                                               # (H, C) f32
        numer = jnp.sum(expt * acc_sc[...], axis=0, keepdims=True)         # (1, C)
        denom = jnp.sum(expt * d_sc[...], axis=0, keepdims=True)           # (1, C)
        o_ref[...] = (numer * pl.reciprocal(denom)).astype(o_ref.dtype)


def attend_module(x, conv_w, conv_b, num_heads, *, tile_p=None):
    """x: (B, C, H, W) NCHW; conv_w: (num_heads, cph, 1, 1); conv_b: (num_heads,)."""
    B, C, H, W = x.shape
    assert C % num_heads == 0
    cph = C // num_heads
    P = H * W

    # Per-head bias is constant along the softmax (spatial) axis -> cancels exactly;
    # it is intentionally not fed to the kernel.
    del conv_b

    # Keep x in its storage dtype across the DMA and inside the kernel.
    x_r = x.reshape(B, C, P)

    # Block-diagonal grouped-conv weight: w_full[h, g*cph + c] = conv_w[g, c] iff g == h,
    # cast to x's dtype so the MXU sees matching native-width operands.
    eye = jnp.eye(num_heads, dtype=jnp.float32)
    w_heads = conv_w.reshape(num_heads, cph).astype(jnp.float32)
    w_full = (eye[:, :, None] * w_heads[None, :, :]).reshape(num_heads, C).astype(x.dtype)
    # Head->channel selector (heads on sublanes): expt[h, g*cph + j] = eye[h, g].
    expt = jnp.repeat(eye, cph, axis=1)                                   # (H, C) f32

    # Generation-aware spatial tile / VMEM budget.
    vmem_cap = _tpu_vmem_capacity_bytes()
    budget = 12 * _MIB if vmem_cap >= 96 * _MIB else 8 * _MIB            # v5e/v6e : v7x
    if tile_p is None:
        tile_p = _choose_spatial_tile(P, C, x.dtype.itemsize, budget)
    n_pt = pl.cdiv(P, tile_p)
    tile_bytes = C * tile_p * x.dtype.itemsize
    vmem_limit = min(vmem_cap * 3 // 4, 2 * tile_bytes + 16 * _MIB)
    vmem_limit = max(int(vmem_limit), 32 * _MIB)

    kernel = functools.partial(attend_kernel, spatial_size=P, tile_p=tile_p)

    # TODO(synk): for v7x small-batch (B==1), add a second parallel grid axis over head
    # groups so both TensorCores have work; omitted here to keep BlockSpecs simple.
    out = pl.pallas_call(
        kernel,
        out_shape=jax.ShapeDtypeStruct((B, 1, C), x.dtype),
        grid_spec=pltpu.PrefetchScalarGridSpec(
            num_scalar_prefetch=0,
            grid=(B, n_pt),
            in_specs=[
                pl.BlockSpec((num_heads, C), lambda b, p: (0, 0)),
                pl.BlockSpec((num_heads, C), lambda b, p: (0, 0)),
                pl.BlockSpec((None, C, tile_p), lambda b, p: (b, 0, p)),
            ],
            out_specs=pl.BlockSpec((None, 1, C), lambda b, p: (b, 0, 0)),
            scratch_shapes=[
                pltpu.VMEM((num_heads, 1), jnp.float32),   # running max
                pltpu.VMEM((num_heads, 1), jnp.float32),   # running denominator
                pltpu.VMEM((num_heads, C), jnp.float32),   # per-head numerator accumulator
            ],
        ),
        compiler_params=pltpu.CompilerParams(
            dimension_semantics=("parallel", "arbitrary"),
            vmem_limit_bytes=int(vmem_limit),
        ),
    )(w_full, expt, x_r)

    return out.reshape(B, C, 1, 1)


def _reference(x, conv_w, conv_b, num_heads):
    """Pure-JAX f32 reference of the PyTorch module (bias included; it cancels)."""
    B, C, H, W = x.shape
    cph = C // num_heads
    xr = x.reshape(B, num_heads, cph, H * W).astype(jnp.float32)
    w = conv_w.reshape(num_heads, cph).astype(jnp.float32)
    logits = jnp.einsum("bhcp,hc->bhp", xr, w, precision=lax.Precision.HIGHEST)
    logits = logits + conv_b.astype(jnp.float32)[None, :, None]
    s = jax.nn.softmax(logits, axis=-1)
    mus = jnp.einsum("bhcp,bhp->bhc", xr, s, precision=lax.Precision.HIGHEST)
    return mus.reshape(B, C, 1, 1)


if __name__ == "__main__":
    key = jax.random.PRNGKey(0)
    num_heads = 4

    # ---- Test 1: aligned spatial extent (single tile path) -----------------
    B, C, H, W = 2, 8, 16, 16
    cph = C // num_heads
    k1, k2, k3, k4 = jax.random.split(key, 4)
    x = jax.random.normal(k1, (B, C, H, W), dtype=jnp.float32)
    conv_w = 0.5 * jax.random.normal(k2, (num_heads, cph, 1, 1), dtype=jnp.float32)
    conv_b = 0.1 * jax.random.normal(k3, (num_heads,), dtype=jnp.float32)

    mus = attend_module(x, conv_w, conv_b, num_heads)
    mus = jax.block_until_ready(mus)
    ref = _reference(x, conv_w, conv_b, num_heads)
    assert mus.shape == (B, C, 1, 1)
    err = float(jnp.max(jnp.abs(mus.astype(jnp.float32) - ref)))
    # Default (single-pass bf16) MXU precision -> loosened tolerance vs exact f32 ref.
    assert jnp.allclose(mus.astype(jnp.float32), ref, atol=5e-2, rtol=5e-2), err

    # ---- Test 2: ragged spatial extent + forced multi-tile online softmax ---
    H2, W2 = 20, 20                        # P = 400, not a multiple of 128
    x2 = jax.random.normal(k4, (B, C, H2, W2), dtype=jnp.float32)
    mus2 = attend_module(x2, conv_w, conv_b, num_heads, tile_p=256)  # 2 tiles, masked tail
    mus2 = jax.block_until_ready(mus2)
    ref2 = _reference(x2, conv_w, conv_b, num_heads)
    err2 = float(jnp.max(jnp.abs(mus2.astype(jnp.float32) - ref2)))
    assert jnp.allclose(mus2.astype(jnp.float32), ref2, atol=5e-2, rtol=5e-2), err2

    print("KERNEL_OK")
</pallas_src>

<mosaic_0001>
module attributes {stable_mosaic.version = 11 : i64} {
  func.func @attend_kernel(%arg0: i32, %arg1: i32, %arg2: memref<4x8xf32, #tpu.memory_space<vmem>>, %arg3: memref<4x8xf32, #tpu.memory_space<vmem>>, %arg4: memref<1x8x256xf32, #tpu.memory_space<vmem>>, %arg5: memref<1x1x8xf32, #tpu.memory_space<vmem>>, %arg6: memref<4x1xf32, #tpu.memory_space<vmem>>, %arg7: memref<4x1xf32, #tpu.memory_space<vmem>>, %arg8: memref<4x8xf32, #tpu.memory_space<vmem>>) attributes {dimension_semantics = [#tpu.dimension_semantics<parallel>, #tpu.dimension_semantics<arbitrary>], iteration_bounds = array<i64: 2, 1>, scalar_prefetch = 0 : i64, scratch_operands = 3 : i64, tpu.core_type = #tpu.core_type<tc>, window_params = [{pipeline_mode = #tpu.pipeline_mode<synchronous>, transform_indices = @transform_0, window_bounds = array<i64: 4, 8>}, {pipeline_mode = #tpu.pipeline_mode<synchronous>, transform_indices = @transform_1, window_bounds = array<i64: 4, 8>}, {transform_indices = @transform_2, window_bounds = array<i64: 1, 8, 256>}, {transform_indices = @transform_3, window_bounds = array<i64: 1, 1, 8>}]} {
    %c0_i32 = arith.constant 0 : i32
    %0 = arith.cmpi eq, %arg1, %c0_i32 : i32
    %1 = arith.extui %0 : i1 to i32
    %c0_i32_0 = arith.constant 0 : i32
    %2 = arith.cmpi ne, %1, %c0_i32_0 : i32
    scf.if %2 {
      %cst_22 = arith.constant 0xFF800000 : f32
      %32 = vector.broadcast %cst_22 : f32 to vector<4x1xf32>
      %c0_23 = arith.constant 0 : index
      %c0_24 = arith.constant 0 : index
      %33 = vector.load %arg6[%c0_23, %c0_24] : memref<4x1xf32, #tpu.memory_space<vmem>>, vector<4x1xf32>
      tpu.vector_store %arg6[%c0_23, %c0_24], %32 {strides = array<i32>} : memref<4x1xf32, #tpu.memory_space<vmem>>, vector<4x1xf32>,
      %cst_25 = arith.constant 0.000000e+00 : f32
      %34 = vector.broadcast %cst_25 : f32 to vector<4x1xf32>
      %c0_26 = arith.constant 0 : index
      %c0_27 = arith.constant 0 : index
      %35 = vector.load %arg7[%c0_26, %c0_27] : memref<4x1xf32, #tpu.memory_space<vmem>>, vector<4x1xf32>
      tpu.vector_store %arg7[%c0_26, %c0_27], %34 {strides = array<i32>} : memref<4x1xf32, #tpu.memory_space<vmem>>, vector<4x1xf32>,
      %cst_28 = arith.constant 0.000000e+00 : f32
      %36 = vector.broadcast %cst_28 : f32 to vector<4x8xf32>
      %c0_29 = arith.constant 0 : index
      %c0_30 = arith.constant 0 : index
      %37 = vector.load %arg8[%c0_29, %c0_30] : memref<4x8xf32, #tpu.memory_space<vmem>>, vector<4x8xf32>
      tpu.vector_store %arg8[%c0_29, %c0_30], %36 {strides = array<i32>} : memref<4x8xf32, #tpu.memory_space<vmem>>, vector<4x8xf32>,
    } else {
    }
    %c0 = arith.constant 0 : index
    %c0_1 = arith.constant 0 : index
    %c0_2 = arith.constant 0 : index
    %3 = vector.load %arg4[%c0, %c0_1, %c0_2] : memref<1x8x256xf32, #tpu.memory_space<vmem>>, vector<1x8x256xf32>
    %4 = vector.shape_cast %3 : vector<1x8x256xf32> to vector<8x256xf32>
    %c0_3 = arith.constant 0 : index
    %c0_4 = arith.constant 0 : index
    %5 = vector.load %arg2[%c0_3, %c0_4] : memref<4x8xf32, #tpu.memory_space<vmem>>, vector<4x8xf32>
    %cst = arith.constant dense<0.000000e+00> : vector<4x256xf32>
    %6 = tpu.matmul %5, %4, %cst {dimension_numbers = #tpu.dot_dimension_numbers<[1], [0], [0], [1], [0, 0, 1, 1], [], []>} : vector<4x8xf32>, vector<8x256xf32>, vector<4x256xf32> -> vector<4x256xf32>
    %c0_5 = arith.constant 0 : index
    %c0_6 = arith.constant 0 : index
    %7 = vector.load %arg6[%c0_5, %c0_6] : memref<4x1xf32, #tpu.memory_space<vmem>>, vector<4x1xf32>
    %cst_7 = arith.constant dense<0xFF800000> : vector<4xf32>
    %8 = vector.multi_reduction <maximumf>, %6, %cst_7 [1] : vector<4x256xf32> to vector<4xf32>
    %9 = vector.shape_cast %8 : vector<4xf32> to vector<4x1xf32>
    %10 = arith.maximumf %7, %9 : vector<4x1xf32>
    %11 = arith.subf %7, %10 : vector<4x1xf32>
    %12 = math.exp %11 : vector<4x1xf32>
    %13 = vector.broadcast %10 : vector<4x1xf32> to vector<4x256xf32>
    %14 = arith.subf %6, %13 : vector<4x256xf32>
    %15 = math.exp %14 : vector<4x256xf32>
    %c0_8 = arith.constant 0 : index
    %c0_9 = arith.constant 0 : index
    %16 = vector.load %arg7[%c0_8, %c0_9] : memref<4x1xf32, #tpu.memory_space<vmem>>, vector<4x1xf32>
    %17 = arith.mulf %12, %16 : vector<4x1xf32>
    %cst_10 = arith.constant dense<0.000000e+00> : vector<4xf32>
    %18 = vector.multi_reduction <add>, %15, %cst_10 [1] : vector<4x256xf32> to vector<4xf32>
    %19 = vector.shape_cast %18 : vector<4xf32> to vector<4x1xf32>
    %20 = arith.addf %17, %19 : vector<4x1xf32>
    %c0_11 = arith.constant 0 : index
    %c0_12 = arith.constant 0 : index
    %21 = vector.load %arg7[%c0_11, %c0_12] : memref<4x1xf32, #tpu.memory_space<vmem>>, vector<4x1xf32>
    tpu.vector_store %arg7[%c0_11, %c0_12], %20 {strides = array<i32>} : memref<4x1xf32, #tpu.memory_space<vmem>>, vector<4x1xf32>,
    %c0_13 = arith.constant 0 : index
    %c0_14 = arith.constant 0 : index
    %22 = vector.load %arg6[%c0_13, %c0_14] : memref<4x1xf32, #tpu.memory_space<vmem>>, vector<4x1xf32>
    tpu.vector_store %arg6[%c0_13, %c0_14], %10 {strides = array<i32>} : memref<4x1xf32, #tpu.memory_space<vmem>>, vector<4x1xf32>,
    %cst_15 = arith.constant dense<0.000000e+00> : vector<4x8xf32>
    %23 = tpu.matmul %15, %4, %cst_15 {dimension_numbers = #tpu.dot_dimension_numbers<[1], [1], [0], [0], [0, 0, 1, 0], [], []>} : vector<4x256xf32>, vector<8x256xf32>, vector<4x8xf32> -> vector<4x8xf32>
    %c0_16 = arith.constant 0 : index
    %c0_17 = arith.constant 0 : index
    %24 = vector.load %arg8[%c0_16, %c0_17] : memref<4x8xf32, #tpu.memory_space<vmem>>, vector<4x8xf32>
    %25 = vector.broadcast %12 : vector<4x1xf32> to vector<4x8xf32>
    %26 = arith.mulf %25, %24 : vector<4x8xf32>
    %27 = arith.addf %26, %23 : vector<4x8xf32>
    %c0_18 = arith.constant 0 : index
    %c0_19 = arith.constant 0 : index
    %28 = vector.load %arg8[%c0_18, %c0_19] : memref<4x8xf32, #tpu.memory_space<vmem>>, vector<4x8xf32>
    tpu.vector_store %arg8[%c0_18, %c0_19], %27 {strides = array<i32>} : memref<4x8xf32, #tpu.memory_space<vmem>>, vector<4x8xf32>,
    %c0_i32_20 = arith.constant 0 : i32
    %29 = arith.cmpi eq, %arg1, %c0_i32_20 : i32
    %30 = arith.extui %29 : i1 to i32
    %c0_i32_21 = arith.constant 0 : i32
    %31 = arith.cmpi ne, %30, %c0_i32_21 : i32
    scf.if %31 {
      %c0_22 = arith.constant 0 : index
      %c0_23 = arith.constant 0 : index
      %32 = vector.load %arg3[%c0_22, %c0_23] : memref<4x8xf32, #tpu.memory_space<vmem>>, vector<4x8xf32>
      %c0_24 = arith.constant 0 : index
      %c0_25 = arith.constant 0 : index
      %33 = vector.load %arg8[%c0_24, %c0_25] : memref<4x8xf32, #tpu.memory_space<vmem>>, vector<4x8xf32>
      %34 = arith.mulf %32, %33 : vector<4x8xf32>
      %cst_26 = arith.constant dense<0.000000e+00> : vector<8xf32>
      %35 = vector.multi_reduction <add>, %34, %cst_26 [0] : vector<4x8xf32> to vector<8xf32>
      %36 = vector.shape_cast %35 : vector<8xf32> to vector<1x8xf32>
      %c0_27 = arith.constant 0 : index
      %c0_28 = arith.constant 0 : index
      %37 = vector.load %arg7[%c0_27, %c0_28] : memref<4x1xf32, #tpu.memory_space<vmem>>, vector<4x1xf32>
      %38 = vector.broadcast %37 : vector<4x1xf32> to vector<4x8xf32>
      %39 = arith.mulf %32, %38 : vector<4x8xf32>
      %cst_29 = arith.constant dense<0.000000e+00> : vector<8xf32>
      %40 = vector.multi_reduction <add>, %39, %cst_29 [0] : vector<4x8xf32> to vector<8xf32>
      %41 = vector.shape_cast %40 : vector<8xf32> to vector<1x8xf32>
      %42 = tpu.reciprocal %41 : vector<1x8xf32> -> vector<1x8xf32>
      %43 = arith.mulf %36, %42 : vector<1x8xf32>
      %c0_30 = arith.constant 0 : index
      %c0_31 = arith.constant 0 : index
      %c0_32 = arith.constant 0 : index
      %44 = vector.load %arg5[%c0_30, %c0_31, %c0_32] : memref<1x1x8xf32, #tpu.memory_space<vmem>>, vector<1x1x8xf32>
      %45 = vector.shape_cast %44 : vector<1x1x8xf32> to vector<1x8xf32>
      %46 = vector.shape_cast %43 : vector<1x8xf32> to vector<1x1x8xf32>
      tpu.vector_store %arg5[%c0_30, %c0_31, %c0_32], %46 {strides = array<i32>} : memref<1x1x8xf32, #tpu.memory_space<vmem>>, vector<1x1x8xf32>,
    } else {
    }
    return
  }
  func.func @transform_0(%arg0: i32, %arg1: i32) -> (i32, i32) {
    %c0_i32 = arith.constant 0 : i32
    %c0_i32_0 = arith.constant 0 : i32
    %c0_i32_1 = arith.constant 0 : i32
    return %c0_i32, %c0_i32_0 : i32, i32
  }
  func.func @transform_1(%arg0: i32, %arg1: i32) -> (i32, i32) {
    %c0_i32 = arith.constant 0 : i32
    %c0_i32_0 = arith.constant 0 : i32
    %c0_i32_1 = arith.constant 0 : i32
    return %c0_i32, %c0_i32_0 : i32, i32
  }
  func.func @transform_2(%arg0: i32, %arg1: i32) -> (i32, i32, i32) {
    %c0_i32 = arith.constant 0 : i32
    %c0_i32_0 = arith.constant 0 : i32
    return %arg0, %c0_i32, %arg1 : i32, i32, i32
  }
  func.func @transform_3(%arg0: i32, %arg1: i32) -> (i32, i32, i32) {
    %c0_i32 = arith.constant 0 : i32
    %c0_i32_0 = arith.constant 0 : i32
    %c0_i32_1 = arith.constant 0 : i32
    return %arg0, %c0_i32, %c0_i32_0 : i32, i32, i32
  }
}

</mosaic_0001>

<llo_original>
// kernel: tpu_custom_call.1
$region0: #{tpu_custom_call.1}
  #allocation0 [shape = 'u32[]', space=smem, size = 0x4, offset = 0x4, fixed_abs, tag = 'smem constant byte address 0x4 - core index']
  #allocation1 [shape = 'u32[144,128]{1,0:T(1,128)}', space=vmem, size = 0x12000, scoped, tag = 'internal scratch']
  #allocation2 [shape = 'f32[4,1]{1,0:T(4,128)}', space=vmem, size = 0x800, scoped, tag = 'scratch operand']
  #allocation3 [shape = 'f32[4,1]{1,0:T(4,128)}', space=vmem, size = 0x800, scoped, tag = 'scratch operand']
  #allocation4 [shape = 'f32[4,8]{1,0:T(4,128)}', space=vmem, size = 0x800, scoped, tag = 'scratch operand']
  %s0 = inlined_call_operand.hbm [shape: f32[4,8], index: 0, kind: input, shape index: {}]
  %s1 = inlined_call_operand.hbm [shape: f32[4,8], index: 1, kind: input, shape index: {}]
  %s2 = inlined_call_operand.hbm [shape: f32[2,8,256], index: 2, kind: input, shape index: {}]
  %s3 = inlined_call_operand.hbm [shape: f32[2,1,8], index: 3, kind: output, shape index: {}]
  %s4 = sld [smem:[#allocation0]]
  $region65: #{tpu_custom_call.1} parent=0
    _
  %s6 = ssub.s32 1, %s4
  %s7 = scalar_select 0, %s6, %s4
  $region1: #{tpu_custom_call.1} parent=0
    #allocation5 [shape = 'u8[2048]{0}', space=vmem, size = 0x800, scoped, tag = 'input window, operand 0, single buffered']
    #allocation6 [shape = 's32[2]{0}', space=sflag, size = 0x8, scoped, tag = 'scoped memory for tpu_custom_call.1']
    #allocation7 [shape = 's32[2]{0}', space=sflag, size = 0x8, scoped, tag = 'scoped memory for tpu_custom_call.1']
    #allocation8 [shape = 'u8[2048]{0}', space=vmem, size = 0x800, scoped, tag = 'input window, operand 1, single buffered']
    #allocation9 [shape = 's32[1]{0}', space=sflag, size = 0x4, scoped, tag = 'scoped memory for tpu_custom_call.1']
    #allocation10 [shape = 'u8[16384]{0}', space=vmem, size = 0x4000, scoped, tag = 'input window, operand 2']
    #allocation11 [shape = 'u8[1024]{0}', space=vmem, size = 0x400, scoped, tag = 'output window, operand 0']
    %8 = vsyncpa [#allocation6], 0
    %9 = vsyncpa [#allocation9], 0
    %10 = vsyncpa [#allocation7], 0
    %s11 = scalar_lea.sflag [#allocation7], 1
    %12 = vsyncpa %s11, 0
    loop: start=0, step=1, limit=4
    $region2: #{tpu_custom_call.1} parent=1 // loop_pre_header
      _
    $region3: #{tpu_custom_call.1} parent=1 // loop_header
      %s14 = sphi 0, %s18
      %p15 = scmp.ge.s32.totalorder %s14, 4
      %s21 = sphi 0, %s33
      %s22 = sphi 0, %s29
      %s23 = sphi 0, %s21
      %s24 = sphi 0, %s22
      %s25 = sphi 0, %s23
      %s26 = sphi 0, %s24
      %s34 = sphi 0, %s34
      %s36 = sphi 0, %s34
      %s37 = sphi 0, %s36
      %s51 = sphi 0, %s37
      %s55 = sphi 0, %s55
      %s57 = sphi 0, %s55
      %s58 = sphi 0, %s57
      %s72 = sphi 0, %s58
      %s80 = sphi 0, %s82
      %s83 = sphi 0, %s80
      %s84 = sphi 0, %s83
      %s100 = sphi 0, %s84
      %s106 = sphi 0, %s108
      %s109 = sphi 0, %s106
      %s110 = sphi 0, %s109
      %s126 = sphi 0, %s110
    $region4: #{tpu_custom_call.1} parent=1 // loop_header_branch
      %17 = sbr.rel (%p15) target = $region8
    $region5: #{tpu_custom_call.1} parent=1 // loop_body
      %s19 = ssub.s32 %s14, 1
      %s20 = ssub.s32 %s14, 2
      %s27 = sadd.s32 1, %s22
      %p28 = scmp.ge.s32.totalorder %s27, 1
      %s29 = scalar_select %p28, 0, %s27
      %s30 = sadd.s32 1, %s21
      %s31 = scalar_select %p28, %s30, %s21
      %p32 = scmp.ge.s32.totalorder %s31, 2
      %s33 = scalar_select %p32, 0, %s31
      %s35 = sadd.s32 %s34, 1
      %p38 = scmp.eq.s32.totalorder %s14, 1
      %p39 = scmp.ne.s32.totalorder %s34, %s36
      %p40 = scmp.eq.s32.totalorder %s14, 0
      %p41 = por %p39, %p40
      %p42 = scmp.ne.s32.totalorder %s34, %s36
      %p43 = scmp.eq.s32.totalorder %s19, 1
      %p44 = por %p42, %p43
      %p45 = scmp.ne.s32.totalorder %s36, %s37
      %p46 = scmp.eq.s32.totalorder %s19, 0
      %p47 = por %p45, %p46
      %p48 = scmp.ne.s32.totalorder %s36, %s37
      %p49 = scmp.eq.s32.totalorder %s20, 1
      %p50 = por %p48, %p49
      %p52 = scmp.ne.s32.totalorder %s37, %s51
      %p53 = scmp.eq.s32.totalorder %s20, 0
      %p54 = por %p52, %p53
      %s56 = sadd.s32 %s55, 1
      %p59 = scmp.eq.s32.totalorder %s14, 1
      %p60 = scmp.ne.s32.totalorder %s55, %s57
      %p61 = scmp.eq.s32.totalorder %s14, 0
      %p62 = por %p60, %p61
      %p63 = scmp.ne.s32.totalorder %s55, %s57
      %p64 = scmp.eq.s32.totalorder %s19, 1
      %p65 = por %p63, %p64
      %p66 = scmp.ne.s32.totalorder %s57, %s58
      %p67 = scmp.eq.s32.totalorder %s19, 0
      %p68 = por %p66, %p67
      %p69 = scmp.ne.s32.totalorder %s57, %s58
      %p70 = scmp.eq.s32.totalorder %s20, 1
      %p71 = por %p69, %p70
      %p73 = scmp.ne.s32.totalorder %s58, %s72
      %p74 = scmp.eq.s32.totalorder %s20, 0
      %p75 = por %p73, %p74
      %s76 = ssub.s32 %s21, %s33
      %s77 = ssub.s32 %s22, %s29
      %s78 = sor.u32 %s76, %s77
      %p79 = scmp.eq.s32.totalorder %s78, 0
      %s81 = sadd.s32 %s80, 1
      %s82 = scalar_select %p79, %s80, %s81
      %p85 = pneg %p79
      %p86 = scmp.eq.s32.totalorder %s14, 1
      %p87 = por %p85, %p86
      %p88 = scmp.ne.s32.totalorder %s80, %s83
      %p89 = scmp.eq.s32.totalorder %s14, 0
      %p90 = por %p88, %p89
      %p91 = scmp.ne.s32.totalorder %s80, %s83
      %p92 = scmp.eq.s32.totalorder %s19, 1
      %p93 = por %p91, %p92
      %p94 = scmp.ne.s32.totalorder %s83, %s84
      %p95 = scmp.eq.s32.totalorder %s19, 0
      %p96 = por %p94, %p95
      %p97 = scmp.ne.s32.totalorder %s83, %s84
      %p98 = scmp.eq.s32.totalorder %s20, 1
      %p99 = por %p97, %p98
      %p101 = scmp.ne.s32.totalorder %s84, %s100
      %p102 = scmp.eq.s32.totalorder %s20, 0
      %p103 = por %p101, %p102
      %s104 = ssub.s32 %s21, %s33
      %p105 = scmp.eq.s32.totalorder %s104, 0
      %s107 = sadd.s32 %s106, 1
      %s108 = scalar_select %p105, %s106, %s107
      %p111 = pneg %p105
      %p112 = scmp.eq.s32.totalorder %s14, 1
      %p113 = por %p111, %p112
      %p114 = scmp.ne.s32.totalorder %s106, %s109
      %p115 = scmp.eq.s32.totalorder %s14, 0
      %p116 = por %p114, %p115
      %p117 = scmp.ne.s32.totalorder %s106, %s109
      %p118 = scmp.eq.s32.totalorder %s19, 1
      %p119 = por %p117, %p118
      %p120 = scmp.ne.s32.totalorder %s109, %s110
      %p121 = scmp.eq.s32.totalorder %s19, 0
      %p122 = por %p120, %p121
      %p123 = scmp.ne.s32.totalorder %s109, %s110
      %p124 = scmp.eq.s32.totalorder %s20, 1
      %p125 = por %p123, %p124
      %p127 = scmp.ne.s32.totalorder %s110, %s126
      %p128 = scmp.eq.s32.totalorder %s20, 0
      %p129 = por %p127, %p128
      %p130 = scmp.le.s32.totalorder 1, %s14
      %p131 = scmp.lt.s32.totalorder %s14, 3
      %p132 = pnand %p130, %p131
      %p133 = pneg %p132
      // Predicated region
      $region9: #{tpu_custom_call.1} parent=5 // pred_check
        _
      $region10: #{tpu_custom_call.1} parent=5 // pred_check_branch
        %135 = sbr.rel (%p132) target = $region12
      $region11: #{tpu_custom_call.1} parent=5 // pred_region
        %s136 = ssub.s32 %s14, 1
        // Predicated region
        $region13: #{tpu_custom_call.1} parent=11 // pred_check
          %p137 = pneg %p47
        $region14: #{tpu_custom_call.1} parent=11 // pred_check_branch
          %139 = sbr.rel (%p137) target = $region16
        $region15: #{tpu_custom_call.1} parent=11 // pred_region
          %s141 = ssub.s32 64, 64
          %142 = vsyncadd [#allocation6], %s141
          %s144 = sshll.u32 [#allocation5], 4
          %s145 = int_to_ptr.vmem [resolvable:$true] %s144
          %147 = dma.hbm_to_vmem [thread:$0]  %s0, 64, %s145, [#allocation6]
        $region16: #{tpu_custom_call.1} parent=11 // pred_fallthru
          _
        // Predicated region
        $region17: #{tpu_custom_call.1} parent=11 // pred_check
          %p148 = pneg %p68
        $region18: #{tpu_custom_call.1} parent=11 // pred_check_branch
          %150 = sbr.rel (%p148) target = $region20
        $region19: #{tpu_custom_call.1} parent=11 // pred_region
          %s152 = ssub.s32 64, 64
          %153 = vsyncadd [#allocation9], %s152
          %s155 = sshll.u32 [#allocation8], 4
          %s156 = int_to_ptr.vmem [resolvable:$true] %s155
          %158 = dma.hbm_to_vmem [thread:$0]  %s1, 64, %s156, [#allocation9]
        $region20: #{tpu_custom_call.1} parent=11 // pred_fallthru
          _
      $region12: #{tpu_custom_call.1} parent=5 // pred_fallthru
        _
      %p159 = scmp.lt.s32.totalorder %s14, 2
      // Predicated region
      $region21: #{tpu_custom_call.1} parent=5 // pred_check
        %p160 = pneg %p159
      $region22: #{tpu_custom_call.1} parent=5 // pred_check_branch
        %162 = sbr.rel (%p160) target = $region24
      $region23: #{tpu_custom_call.1} parent=5 // pred_region
        // Predicated region
        $region25: #{tpu_custom_call.1} parent=23 // pred_check
          %p163 = pneg %p90
        $region26: #{tpu_custom_call.1} parent=23 // pred_check_branch
          %165 = sbr.rel (%p163) target = $region28
        $region27: #{tpu_custom_call.1} parent=23 // pred_region
          %s166 = sand.u32 %s14, 1
          %s167 = scalar_lea.sflag [#allocation6], %s166
          %s168 = sand.u32 %s80, 1
          %s169 = smul.addr %s168, 16
          %s170 = scalar_lea.vmem [#allocation10], %s169
          %s171 = smul.u32 2, %s22
          %s173 = ssub.s32 256, 256
          %174 = vsyncadd %s167, %s173
          %s175 = smul.addr %s21, 2
          %s176 = sadd.s32 %s171, %s175
          %s177 = smul.addr %s176, 128
          %s178 = scalar_lea.hbm %s2, %s177
          %s180 = sshll.u32 %s170, 4
          %s181 = int_to_ptr.vmem [resolvable:$true] %s180
          %183 = dma.hbm_to_vmem [thread:$0]  %s178, 256, %s181, %s167
        $region28: #{tpu_custom_call.1} parent=23 // pred_fallthru
          _
      $region24: #{tpu_custom_call.1} parent=5 // pred_fallthru
        _
      %p184 = scmp.le.s32.totalorder 1, %s14
      %p185 = scmp.lt.s32.totalorder %s14, 3
      %p186 = pnand %p184, %p185
      %p187 = pneg %p186
      // Predicated region
      $region29: #{tpu_custom_call.1} parent=5 // pred_check
        _
      $region30: #{tpu_custom_call.1} parent=5 // pred_check_branch
        %189 = sbr.rel (%p186) target = $region32
      $region31: #{tpu_custom_call.1} parent=5 // pred_region
        %s190 = ssub.s32 %s14, 1
        // Predicated region
        $region33: #{tpu_custom_call.1} parent=31 // pred_check
          %p191 = pneg %p47
        $region34: #{tpu_custom_call.1} parent=31 // pred_check_branch
          %193 = sbr.rel (%p191) target = $region36
        $region35: #{tpu_custom_call.1} parent=31 // pred_region
          %194 = dma.done [#allocation6], 64
        $region36: #{tpu_custom_call.1} parent=31 // pred_fallthru
          _
        // Predicated region
        $region37: #{tpu_custom_call.1} parent=31 // pred_check
          %p195 = pneg %p68
        $region38: #{tpu_custom_call.1} parent=31 // pred_check_branch
          %197 = sbr.rel (%p195) target = $region40
        $region39: #{tpu_custom_call.1} parent=31 // pred_region
          %198 = dma.done [#allocation9], 64
        $region40: #{tpu_custom_call.1} parent=31 // pred_fallthru
          _
        %s199 = sand.u32 %s19, 1
        %s200 = scalar_lea.sflag [#allocation6], %s199
        %s201 = sand.u32 %s83, 1
        %s202 = smul.addr %s201, 16
        %s203 = scalar_lea.vmem [#allocation10], %s202
        // Predicated region
        $region41: #{tpu_custom_call.1} parent=31 // pred_check
          %p204 = pneg %p96
        $region42: #{tpu_custom_call.1} parent=31 // pred_check_branch
          %206 = sbr.rel (%p204) target = $region44
        $region43: #{tpu_custom_call.1} parent=31 // pred_region
          %207 = dma.done %s200, 256
        $region44: #{tpu_custom_call.1} parent=31 // pred_fallthru
          _
        %p208 = pneg %p47
        %p209 = pneg %p44
        %p210 = pneg %p68
        %p211 = pneg %p65
        %s212 = sand.u32 %s19, 1
        %s213 = scalar_lea.sflag [#allocation6], %s212
        %s214 = sand.u32 %s83, 1
        %s215 = smul.addr %s214, 16
        %s216 = scalar_lea.vmem [#allocation10], %s215
        %p217 = pneg %p96
        %p218 = pneg %p93
        %p219 = pneg %p122
        %p220 = pneg %p119
        %s221 = sand.u32 %s109, 1
        %s222 = scalar_lea.sflag [#allocation7], %s221
        %s223 = sand.u32 %s109, 1
        %s224 = scalar_lea.vmem [#allocation11], %s223
        %s225 = smul.u32 2, %s24
        %p226 = scmp.eq.s32.totalorder %s24, 0
        // Predicated region
        $region45: #{tpu_custom_call.1} parent=31 // pred_check
          %p227 = pneg %p226
        $region46: #{tpu_custom_call.1} parent=31 // pred_check_branch
          %229 = sbr.rel (%p227) target = $region48
        $region47: #{tpu_custom_call.1} parent=31 // pred_region
          %vm230 = vcmask 3072
          %231 = vst.msk [vmem:[#allocation2] sm:$0xf] %vm230, -inf
          %232 = vst.msk [vmem:[#allocation3] sm:$0xf] %vm230, 0.0
          %vm233 = vcmask 60416
          %234 = vst.msk [vmem:[#allocation4] sm:$0xf] %vm233, 0.0
        $region48: #{tpu_custom_call.1} parent=31 // pred_fallthru
          _
        %v235 = vld [vmem:[%s203] sm:$0xff]
        %v236 = vld [vmem:[%s203 + $0x8] sm:$0xff]
        %v237 = vld [vmem:[#allocation5] sm:$0xf]
        %vm238 = vcmask 64512
        %v240 = vsel %vm238, %v237, 0
        %242 = vmatprep.subr.mxu0 0.0
        %243 = vmatpush1.msra.mxu0 0.0
        %244 = vmatprep.subr.mxu0 0.0
        %245 = vmatpush1.msra.mxu0 0.0
        %246 = vmatprep.subr.mxu0 0.0
        %247 = vmatpush1.msra.mxu0 0.0
        %248 = vmatprep.subr.mxu0 0.0
        %249 = vmatpush1.msra.mxu0 0.0
        %250 = vmatprep.subr.mxu0 0.0
        %251 = vmatpush1.msra.mxu0 0.0
        %252 = vmatprep.subr.mxu0 0.0
        %253 = vmatpush1.msra.mxu0 0.0
        %254 = vmatprep.subr.mxu0 0.0
        %255 = vmatpush1.msra.mxu0 0.0
        %256 = vmatprep.subr.mxu0 0.0
        %257 = vmatpush1.msra.mxu0 0.0
        %258 = vmatprep.subr.mxu0 0.0
        %259 = vmatpush1.msra.mxu0 0.0
        %260 = vmatprep.subr.mxu0 0.0
        %261 = vmatpush1.msra.mxu0 0.0
        %262 = vmatprep.subr.mxu0 0.0
        %263 = vmatpush1.msra.mxu0 0.0
        %264 = vmatprep.subr.mxu0 0.0
        %265 = vmatpush1.msra.mxu0 0.0
        %266 = vmatprep.subr.mxu0 0.0
        %267 = vmatpush1.msra.mxu0 0.0
        %268 = vmatprep.subr.mxu0 0.0
        %269 = vmatpush1.msra.mxu0 0.0
        %270 = vmatprep.subr.mxu0 0.0
        %271 = vmatpush1.msra.mxu0 0.0
        %272 = vmatprep.subr.mxu0 %v236
        %273 = vmatpush1.msra.mxu0 %v235
        %274 = vmatprep.subr.mxu0 0.0
        %275 = vmatpush2.msra.mxu0 0.0
        %276 = vmatprep.subr.mxu0 0.0
        %277 = vmatpush2.msra.mxu0 0.0
        %278 = vmatprep.subr.mxu0 0.0
        %279 = vmatpush2.msra.mxu0 0.0
        %280 = vmatprep.subr.mxu0 0.0
        %281 = vmatpush2.msra.mxu0 0.0
        %282 = vmatprep.subr.mxu0 0.0
        %283 = vmatpush2.msra.mxu0 0.0
        %284 = vmatprep.subr.mxu0 0.0
        %285 = vmatpush2.msra.mxu0 0.0
        %286 = vmatprep.subr.mxu0 0.0
        %287 = vmatpush2.msra.mxu0 0.0
        %288 = vmatprep.subr.mxu0 0.0
        %289 = vmatpush2.msra.mxu0 0.0
        %290 = vmatprep.subr.mxu0 0.0
        %291 = vmatpush2.msra.mxu0 0.0
        %292 = vmatprep.subr.mxu0 0.0
        %293 = vmatpush2.msra.mxu0 0.0
        %294 = vmatprep.subr.mxu0 0.0
        %295 = vmatpush2.msra.mxu0 0.0
        %296 = vmatprep.subr.mxu0 0.0
        %297 = vmatpush2.msra.mxu0 0.0
        %298 = vmatprep.subr.mxu0 0.0
        %299 = vmatpush2.msra.mxu0 0.0
        %300 = vmatprep.subr.mxu0 0.0
        %301 = vmatpush2.msra.mxu0 0.0
        %302 = vmatprep.subr.mxu0 0.0
        %303 = vmatpush2.msra.mxu0 0.0
        %304 = vmatprep.subr.mxu0 0.0
        %305 = vmatpush2.msra.mxu0 0.0
        %306 = vmatprep.mubr.f32.mxu0 0.0
        %307 = vmatmul.mubr.f32.gmra.mxu0 %v240
        %v308 = vpop.f32.mrf.mxu0
        %v309 = vadd.f32 0.0, %v308
        %v310 = vpop.f32.mrf.mxu0
        %v311 = vadd.f32 0.0, %v310
        %312 = vdwg.mxu0
        %v313 = vld [vmem:[#allocation2] sm:$0xf]
        %vm314 = vcmask 1043456
        %v315 = vsel %vm314, %v309, -inf
        %v316 = vsel %vm314, %v311, -inf
        %v317 = vmax.f32 %v315, %v316
        %318 = vmax.xlane.f32.xlu0 %v317
        %v319 = vpop.xlane.xlu0 %318
        %v320 = vmax.f32 %v313, %v319
        %v321 = vsub.f32 %v313, %v320
        %v322 = vmul.f32 %v321, 1.442695
        %v323 = vpow.pop %v322
        %325 = vset.pattern.permute.xlu0 0
        %326 = vperm.xlu0 %325, %v320
        %v327 = vpop.permute.xlu0 %326
        %v329 = vsub.f32 %v309, %v327
        %v330 = vsub.f32 %v311, %v327
        %v331 = vmul.f32 %v329, 1.442695
        %v332 = vpow.pop %v331
        %v333 = vmul.f32 %v330, 1.442695
        %v334 = vpow.pop %v333
        %v335 = vld [vmem:[#allocation3] sm:$0xf]
        %v336 = vmul.f32 %v323, %v335
        %v337 = vsel %vm314, %v332, 0.0
        %v338 = vsel %vm314, %v334, 0.0
        %v339 = vadd.f32 %v337, %v338
        %340 = vadd.xlane.f32.xlu0 %v339
        %v341 = vpop.xlane.xlu0 %340
        %v342 = vadd.f32 %v336, %v341
        %vm343 = vcmask 3072
        %344 = vst.msk [vmem:[#allocation3] sm:$0xf] %vm343, %v342
        %345 = vst.msk [vmem:[#allocation2] sm:$0xf] %vm343, %v320
        %346 = vmatprep.subr.mxu0 0.0
        %347 = vmatpush1.xpose.msra.mxu0 0.0
        %348 = vmatprep.subr.mxu0 0.0
        %349 = vmatpush1.xpose.msra.mxu0 0.0
        %350 = vmatprep.subr.mxu0 0.0
        %351 = vmatpush1.xpose.msra.mxu0 0.0
        %352 = vmatprep.subr.mxu0 0.0
        %353 = vmatpush1.xpose.msra.mxu0 0.0
        %354 = vmatprep.subr.mxu0 0.0
        %355 = vmatpush1.xpose.msra.mxu0 0.0
        %356 = vmatprep.subr.mxu0 0.0
        %357 = vmatpush1.xpose.msra.mxu0 0.0
        %358 = vmatprep.subr.mxu0 0.0
        %359 = vmatpush1.xpose.msra.mxu0 0.0
        %360 = vmatprep.subr.mxu0 0.0
        %361 = vmatpush1.xpose.msra.mxu0 0.0
        %362 = vmatprep.subr.mxu0 0.0
        %363 = vmatpush1.xpose.msra.mxu0 0.0
        %364 = vmatprep.subr.mxu0 0.0
        %365 = vmatpush1.xpose.msra.mxu0 0.0
        %366 = vmatprep.subr.mxu0 0.0
        %367 = vmatpush1.xpose.msra.mxu0 0.0
        %368 = vmatprep.subr.mxu0 0.0
        %369 = vmatpush1.xpose.msra.mxu0 0.0
        %370 = vmatprep.subr.mxu0 0.0
        %371 = vmatpush1.xpose.msra.mxu0 0.0
        %372 = vmatprep.subr.mxu0 0.0
        %373 = vmatpush1.xpose.msra.mxu0 0.0
        %374 = vmatprep.subr.mxu0 0.0
        %375 = vmatpush1.xpose.msra.mxu0 0.0
        %376 = vmatprep.subr.mxu0 %v236
        %377 = vmatpush1.xpose.msra.mxu0 %v235
        %378 = vmatprep.subr.mxu0 0.0
        %379 = vmatpush2.xpose.msra.mxu0 0.0
        %380 = vmatprep.subr.mxu0 0.0
        %381 = vmatpush2.xpose.msra.mxu0 0.0
        %382 = vmatprep.subr.mxu0 0.0
        %383 = vmatpush2.xpose.msra.mxu0 0.0
        %384 = vmatprep.subr.mxu0 0.0
        %385 = vmatpush2.xpose.msra.mxu0 0.0
        %386 = vmatprep.subr.mxu0 0.0
        %387 = vmatpush2.xpose.msra.mxu0 0.0
        %388 = vmatprep.subr.mxu0 0.0
        %389 = vmatpush2.xpose.msra.mxu0 0.0
        %390 = vmatprep.subr.mxu0 0.0
        %391 = vmatpush2.xpose.msra.mxu0 0.0
        %392 = vmatprep.subr.mxu0 0.0
        %393 = vmatpush2.xpose.msra.mxu0 0.0
        %394 = vmatprep.subr.mxu0 0.0
        %395 = vmatpush2.xpose.msra.mxu0 0.0
        %396 = vmatprep.subr.mxu0 0.0
        %397 = vmatpush2.xpose.msra.mxu0 0.0
        %398 = vmatprep.subr.mxu0 0.0
        %399 = vmatpush2.xpose.msra.mxu0 0.0
        %400 = vmatprep.subr.mxu0 0.0
        %401 = vmatpush2.xpose.msra.mxu0 0.0
        %402 = vmatprep.subr.mxu0 0.0
        %403 = vmatpush2.xpose.msra.mxu0 0.0
        %404 = vmatprep.subr.mxu0 0.0
        %405 = vmatpush2.xpose.msra.mxu0 0.0
        %406 = vmatprep.subr.mxu0 0.0
        %407 = vmatpush2.xpose.msra.mxu0 0.0
        %408 = vmatprep.subr.mxu0 0.0
        %409 = vmatpush2.xpose.msra.mxu0 0.0
        %410 = vmatprep.mubr.f32.mxu0 %v334
        %411 = vmatmul.mubr.f32.gmra.mxu0 %v332
        %v412 = vpop.f32.mrf.mxu0
        %v413 = vadd.f32 0.0, %v412
        %v414 = vpop.f32.mrf.mxu0
        %415 = vdwg.mxu0
        %v416 = vld [vmem:[#allocation4] sm:$0xf]
        %418 = vset.pattern.permute.xlu0 0
        %419 = vperm.xlu0 %418, %v323
        %v420 = vpop.permute.xlu0 %419
        %v422 = vmul.f32 %v420, %v416
        %v423 = vadd.f32 %v422, %v413
        %vm424 = vcmask 60416
        %425 = vst.msk [vmem:[#allocation4] sm:$0xf] %vm424, %v423
        // Predicated region
        $region49: #{tpu_custom_call.1} parent=31 // pred_check
          %p426 = pneg %p226
        $region50: #{tpu_custom_call.1} parent=31 // pred_check_branch
          %428 = sbr.rel (%p426) target = $region52
        $region51: #{tpu_custom_call.1} parent=31 // pred_region
          %v429 = vld [vmem:[#allocation8] sm:$0xf]
          %v430 = vld [vmem:[#allocation4] sm:$0xf]
          %v431 = vmul.f32 %v429, %v430
          %v432 = vsel %vm424, %v431, 0.0
          %v433 = vrot.slane %v432, 4
          %v434 = vadd.f32 %v432, %v433
          %v435 = vrot.slane %v434, 2
          %v436 = vadd.f32 %v434, %v435
          %v437 = vrot.slane %v436, 1
          %v438 = vadd.f32 %v436, %v437
          %v439 = vld [vmem:[#allocation3] sm:$0xf]
          %441 = vset.pattern.permute.xlu0 0
          %442 = vperm.xlu0 %441, %v439
          %v443 = vpop.permute.xlu0 %442
          %v445 = vmul.f32 %v429, %v443
          %v446 = vsel %vm424, %v445, 0.0
          %v447 = vrot.slane %v446, 4
          %v448 = vadd.f32 %v446, %v447
          %v449 = vrot.slane %v448, 2
          %v450 = vadd.f32 %v448, %v449
          %v451 = vrot.slane %v450, 1
          %v452 = vadd.f32 %v450, %v451
          %v453 = vrcp.pop %v452
          %v454 = vmul.f32 %v438, %v453
          %vm455 = vcmask 57344
          %456 = vst.msk [vmem:[%s224] sm:$0x1] %vm455, %v454
        $region52: #{tpu_custom_call.1} parent=31 // pred_fallthru
          _
        %s457 = sand.u32 %s109, 1
        %s458 = scalar_lea.sflag [#allocation7], %s457
        %s459 = sand.u32 %s109, 1
        %s460 = scalar_lea.vmem [#allocation11], %s459
        // Predicated region
        $region53: #{tpu_custom_call.1} parent=31 // pred_check
          %p461 = pneg %p119
        $region54: #{tpu_custom_call.1} parent=31 // pred_check_branch
          %463 = sbr.rel (%p461) target = $region56
        $region55: #{tpu_custom_call.1} parent=31 // pred_region
          %s465 = ssub.s32 16, 16
          %466 = vsyncadd %s458, %s465
          %s467 = smul.addr %s23, 16
          %s468 = scalar_lea.hbm %s3, %s467
          %s470 = sshll.u32 %s460, 4
          %s471 = int_to_ptr.vmem [resolvable:$true] %s470
          %473 = dma.vmem_to_hbm [thread:$0]  %s471, 16, %s468, %s458
        $region56: #{tpu_custom_call.1} parent=31 // pred_fallthru
          _
      $region32: #{tpu_custom_call.1} parent=5 // pred_fallthru
        _
      %p474 = scmp.le.s32.totalorder 2, %s14
      // Predicated region
      $region57: #{tpu_custom_call.1} parent=5 // pred_check
        %p475 = pneg %p474
      $region58: #{tpu_custom_call.1} parent=5 // pred_check_branch
        %477 = sbr.rel (%p475) target = $region60
      $region59: #{tpu_custom_call.1} parent=5 // pred_region
        %s478 = ssub.s32 %s14, 2
        // Predicated region
        $region61: #{tpu_custom_call.1} parent=59 // pred_check
          %p479 = pneg %p125
        $region62: #{tpu_custom_call.1} parent=59 // pred_check_branch
          %481 = sbr.rel (%p479) target = $region64
        $region63: #{tpu_custom_call.1} parent=59 // pred_region
          %s482 = sand.u32 %s110, 1
          %s483 = scalar_lea.sflag [#allocation7], %s482
          %s484 = sand.u32 %s110, 1
          %s485 = scalar_lea.vmem [#allocation11], %s484
          %486 = dma.done %s483, 16
        $region64: #{tpu_custom_call.1} parent=59 // pred_fallthru
          _
      $region60: #{tpu_custom_call.1} parent=5 // pred_fallthru
        _
    $region6: #{tpu_custom_call.1} parent=1 // loop_footer
      %s18 = sadd.s32 1, %s14
    $region7: #{tpu_custom_call.1} parent=1 // loop_footer_branch
      %13 = sbr.rel target = $region3
    $region8: #{tpu_custom_call.1} parent=1 // loop_exit
      _
    %487 = vsyncpa [#allocation6], 1
    %s488 = scalar_lea.sflag [#allocation6], 1
    %489 = vsyncpa %s488, 1
    %490 = vsyncpa [#allocation9], 1
    %491 = vsyncpa [#allocation7], 1
    %s492 = scalar_lea.sflag [#allocation7], 1
    %493 = vsyncpa %s492, 1

</llo_original>
